<compile_context>
chip_gen: v5e
topology: v5e:2x2
jax: 0.10.0
libtpu: 0.0.40
codegen_flags: <defaults>
</compile_context>

<pallas_src>
import jax
import jax.numpy as jnp
from jax.experimental import pallas as pl
from jax.experimental.pallas import tpu as pltpu


def _round_up(a, b):
    return ((a + b - 1) // b) * b


# --------------------------------------------------------------------------- #
# Kernels
# --------------------------------------------------------------------------- #
def _resident_kernel(x_ref, u_ref, d_ref, o_ref):
    """y = ((x @ U) * d) @ U^T with U fully resident in VMEM."""
    x = x_ref[...]                       # (TN, Dp)  compute dtype
    u = u_ref[...]                       # (Dp, Dp)  compute dtype
    # First pass: xu = x @ U  (NN form).
    xu = jax.lax.dot_general(x, u, (((1,), (0,)), ((), ())),
                             preferred_element_type=jnp.float32)
    # Column scale by the wrapper-precomputed soft-rounded diag (f32 VPU).
    xud = (xu * d_ref[...]).astype(u.dtype)
    # Second pass: y = xud @ U^T  (NT form — contracts last dims of both operands).
    # TODO(synk): confirm via pl.lower_as_mlir / bundle dump that the NT dot lowers
    # without an XLU vxpose; if not, pass a precomputed U^T instead.
    y = jax.lax.dot_general(xud, u, (((1,), (1,)), ((), ())),
                            preferred_element_type=jnp.float32)
    o_ref[...] = y.astype(o_ref.dtype)


def _dtiled_kernel(x_ref, ucol_ref, ublk_ref, d_ref, o_ref, xu_ref, acc_ref):
    """D-tiled fallback: grid = (batch tile b, out-col tile j, inner tile k)."""
    j = pl.program_id(1)
    k = pl.program_id(2)
    td = ublk_ref.shape[-1]
    off = pl.multiple_of(k * td, td)

    @pl.when(k == 0)
    def _():
        acc_ref[...] = jnp.zeros_like(acc_ref)

    # Fill the persistent xu scratch once per batch tile (only on the j == 0 sweep).
    @pl.when(j == 0)
    def _():
        xu = jax.lax.dot_general(x_ref[...], ucol_ref[...],
                                 (((1,), (0,)), ((), ())),
                                 preferred_element_type=jnp.float32)
        xu_ref[:, pl.ds(off, td)] = (xu * d_ref[...]).astype(xu_ref.dtype)

    # acc[:, j] += xud[:, k] @ U[j, k]^T   (NT form, f32 accumulation).
    acc_ref[...] += jax.lax.dot_general(
        xu_ref[:, pl.ds(off, td)], ublk_ref[...], (((1,), (1,)), ((), ())),
        preferred_element_type=jnp.float32)

    @pl.when(k == pl.num_programs(2) - 1)
    def _():
        o_ref[...] = acc_ref[...].astype(o_ref.dtype)


# --------------------------------------------------------------------------- #
# Wrapper
# --------------------------------------------------------------------------- #
def projection_forward(x, U, diag, *, block_n=512, block_d=512,
                       compute_dtype=jnp.float32,
                       vmem_budget_bytes=48 * 2**20,
                       force_d_tiling=False):
    """x: (..., D), U: (D, D) orthogonal, diag: (D,) raw diag parameter."""
    D = x.shape[-1]
    lead_shape = x.shape[:-1]
    x2d = x.reshape(-1, D)
    N = x2d.shape[0]
    orig_dtype = x.dtype
    cbytes = jnp.dtype(compute_dtype).itemsize
    obytes = jnp.dtype(orig_dtype).itemsize

    # Soft-rounding chain, done once in the wrapper (tiny D-length op, stays f32).
    d = jax.nn.sigmoid(diag.astype(jnp.float32))
    d = jax.nn.sigmoid(50.0 * (d - 0.5))
    d = jax.nn.sigmoid(50.0 * (d - 0.5))

    Dp = _round_up(D, 128)                       # lane-dense feature width

    # Batch tiling: no batch padding; Pallas masks the ragged last tile.
    TN = min(block_n, _round_up(N, 8))
    if N > 8 and pl.cdiv(N, TN) < 2:
        # Ensure >= 2 batch tiles so the "parallel" axis spans both v7x TensorCores.
        TN = _round_up(pl.cdiv(N, 2), 8)
    nb = pl.cdiv(N, TN)

    use_resident = (not force_d_tiling) and (
        Dp * Dp * cbytes <= vmem_budget_bytes // 4)

    if use_resident:
        # ------------------------- resident-U fast path -----------------------
        pad = Dp - D
        x_in = x2d.astype(compute_dtype)
        U_in = U.astype(compute_dtype)
        d_in = d
        if pad:
            x_in = jnp.pad(x_in, ((0, 0), (0, pad)))
            U_in = jnp.pad(U_in, ((0, pad), (0, pad)))
            d_in = jnp.pad(d_in, (0, pad))
        d_in = d_in.reshape(1, Dp)

        # Honest VMEM accounting: 2x x tile + 2x out tile + 1x U (single-buffered)
        # + d, with headroom, capped below v7x's 64 MiB per TensorCore.
        need = (2 * TN * Dp * cbytes + 2 * TN * Dp * obytes
                + Dp * Dp * cbytes + Dp * 4)
        vmem_limit = int(min(vmem_budget_bytes,
                             max(2 * need + (4 << 20), 16 << 20)))

        cost = pl.CostEstimate(
            flops=4 * N * Dp * Dp,                     # two N*Dp^2 matmuls
            transcendentals=0,                         # sigmoids hoisted to wrapper
            bytes_accessed=N * Dp * (cbytes + obytes) + Dp * Dp * cbytes + Dp * 4,
        )

        out = pl.pallas_call(
            _resident_kernel,
            out_shape=jax.ShapeDtypeStruct((N, Dp), orig_dtype),
            grid_spec=pltpu.PrefetchScalarGridSpec(
                num_scalar_prefetch=0,
                grid=(nb,),
                in_specs=[
                    pl.BlockSpec((TN, Dp), lambda i: (i, 0)),     # x batch tiles
                    pl.BlockSpec((Dp, Dp), lambda i: (0, 0),      # U resident,
                                 pipeline_mode=pl.Buffered(1)),   #   single buffer
                    pl.BlockSpec((1, Dp), lambda i: (0, 0),       # soft-rounded diag
                                 pipeline_mode=pl.Buffered(1)),
                ],
                out_specs=pl.BlockSpec((TN, Dp), lambda i: (i, 0)),
            ),
            compiler_params=pltpu.CompilerParams(
                dimension_semantics=("parallel",),
                vmem_limit_bytes=vmem_limit,
            ),
            cost_estimate=cost,
        )(x_in, U_in, d_in)

    else:
        # --------------------------- D-tiled fallback --------------------------
        TD = min(_round_up(block_d, 128), Dp)
        # Keep the (Dp, TD) U-column slab a modest fraction of the budget.
        while TD > 128 and 2 * Dp * TD * cbytes > vmem_budget_bytes // 3:
            TD = max(128, (TD // 2 // 128) * 128)
        Dp_t = _round_up(Dp, TD)                 # feature dim padded to TD multiple
        nd = Dp_t // TD

        def _need(tn):
            return (2 * tn * Dp_t * cbytes        # x tiles
                    + 2 * Dp_t * TD * cbytes      # U column slabs (first dot)
                    + 2 * TD * TD * cbytes        # U (j,k) blocks (second dot)
                    + 2 * TD * 4                  # d blocks
                    + 2 * tn * TD * obytes        # out tiles
                    + tn * Dp_t * cbytes          # xu scratch
                    + tn * TD * 4)                # acc scratch

        while _need(TN) > vmem_budget_bytes and TN > 8:
            TN = max(8, _round_up(TN // 2, 8))
        nb = pl.cdiv(N, TN)

        pad = Dp_t - D
        x_in = x2d.astype(compute_dtype)
        U_in = U.astype(compute_dtype)
        d_in = d
        if pad:
            x_in = jnp.pad(x_in, ((0, 0), (0, pad)))
            U_in = jnp.pad(U_in, ((0, pad), (0, pad)))
            d_in = jnp.pad(d_in, (0, pad))
        d_in = d_in.reshape(1, Dp_t)

        vmem_limit = int(min(vmem_budget_bytes,
                             max(2 * _need(TN) + (4 << 20), 16 << 20)))
        cost = pl.CostEstimate(
            flops=4 * N * Dp_t * Dp_t,
            transcendentals=0,
            bytes_accessed=(N * Dp_t * (cbytes + obytes)
                            + 2 * Dp_t * Dp_t * cbytes + Dp_t * 4),
        )

        out = pl.pallas_call(
            _dtiled_kernel,
            out_shape=jax.ShapeDtypeStruct((N, Dp_t), orig_dtype),
            grid_spec=pltpu.PrefetchScalarGridSpec(
                num_scalar_prefetch=0,
                grid=(nb, nd, nd),
                in_specs=[
                    # x: full feature width; re-fetched only when b changes.
                    pl.BlockSpec((TN, Dp_t), lambda b, j, k: (b, 0)),
                    # U column slab for the first dot: only needed on the j==0
                    # sweep; pin to block 0 for j>0 so it is not re-fetched.
                    pl.BlockSpec((Dp_t, TD),
                                 lambda b, j, k: (0, jnp.where(j == 0, k, 0))),
                    # U (j,k) block for the second dot.
                    pl.BlockSpec((TD, TD), lambda b, j, k: (j, k)),
                    # soft-rounded diag slice.
                    pl.BlockSpec((1, TD), lambda b, j, k: (0, k)),
                ],
                out_specs=pl.BlockSpec((TN, TD), lambda b, j, k: (b, j)),
                scratch_shapes=[
                    pltpu.VMEM((TN, Dp_t), compute_dtype),   # xu = (x @ U) * d
                    pltpu.VMEM((TN, TD), jnp.float32),       # f32 accumulator
                ],
            ),
            compiler_params=pltpu.CompilerParams(
                dimension_semantics=("parallel", "arbitrary", "arbitrary"),
                vmem_limit_bytes=vmem_limit,
            ),
            cost_estimate=cost,
        )(x_in, U_in, U_in, d_in)

    if out.shape[-1] != D:
        out = out[:, :D]
    return out.reshape(*lead_shape, D)


def _reference_forward(x, U, diag):
    d = jax.nn.sigmoid(diag)
    d = jax.nn.sigmoid(50.0 * (d - 0.5))
    d = jax.nn.sigmoid(50.0 * (d - 0.5))
    M = (U * d) @ U.T            # U @ diag(d) @ U.T
    return x @ M.T


if __name__ == "__main__":
    key = jax.random.PRNGKey(0)
    k_x, k_u, k_d, k_x2, k_u2, k_d2 = jax.random.split(key, 6)

    # ProjectionNetwork(input_dim=32) on a batch of 8 vectors.
    D, N = 32, 8
    U, _ = jnp.linalg.qr(jax.random.normal(k_u, (D, D), dtype=jnp.float32))
    U = U.astype(jnp.float32)
    diag = jax.random.normal(k_d, (D,), dtype=jnp.float32)
    x = jax.random.normal(k_x, (N, D), dtype=jnp.float32)

    out = jax.block_until_ready(projection_forward(x, U, diag))
    ref = _reference_forward(x, U, diag)
    assert out.shape == (N, D)
    err = float(jnp.max(jnp.abs(out - ref)))
    assert jnp.allclose(out, ref, atol=1e-3, rtol=1e-3), f"resident path err={err}"

    # Exercise the D-tiled fallback (forced), with ragged batch tiles and >1 D tile.
    D2, N2 = 256, 24
    U2, _ = jnp.linalg.qr(jax.random.normal(k_u2, (D2, D2), dtype=jnp.float32))
    U2 = U2.astype(jnp.float32)
    diag2 = jax.random.normal(k_d2, (D2,), dtype=jnp.float32)
    x2 = jax.random.normal(k_x2, (N2, D2), dtype=jnp.float32)
    out2 = jax.block_until_ready(
        projection_forward(x2, U2, diag2, block_n=16, block_d=128,
                           force_d_tiling=True))
    ref2 = _reference_forward(x2, U2, diag2)
    assert out2.shape == (N2, D2)
    err2 = float(jnp.max(jnp.abs(out2 - ref2)))
    assert jnp.allclose(out2, ref2, atol=1e-3, rtol=1e-3), f"tiled path err={err2}"

    print("KERNEL_OK")
</pallas_src>

<mosaic_0001>
module attributes {stable_mosaic.version = 11 : i64} {
  func.func @_resident_kernel(%arg0: i32, %arg1: memref<8x128xf32, #tpu.memory_space<vmem>>, %arg2: memref<128x128xf32, #tpu.memory_space<vmem>>, %arg3: memref<1x128xf32, #tpu.memory_space<vmem>>, %arg4: memref<8x128xf32, #tpu.memory_space<vmem>>) attributes {dimension_semantics = [#tpu.dimension_semantics<parallel>], iteration_bounds = array<i64: 1>, scalar_prefetch = 0 : i64, scratch_operands = 0 : i64, tpu.core_type = #tpu.core_type<tc>, window_params = [{transform_indices = @transform_0, window_bounds = array<i64: 8, 128>}, {pipeline_mode = #tpu.pipeline_mode<synchronous>, transform_indices = @transform_1, window_bounds = array<i64: 128, 128>}, {pipeline_mode = #tpu.pipeline_mode<synchronous>, transform_indices = @transform_2, window_bounds = array<i64: 1, 128>}, {transform_indices = @transform_3, window_bounds = array<i64: 8, 128>}]} {
    %c0 = arith.constant 0 : index
    %c0_0 = arith.constant 0 : index
    %0 = vector.load %arg1[%c0, %c0_0] : memref<8x128xf32, #tpu.memory_space<vmem>>, vector<8x128xf32>
    %c0_1 = arith.constant 0 : index
    %c0_2 = arith.constant 0 : index
    %1 = vector.load %arg2[%c0_1, %c0_2] : memref<128x128xf32, #tpu.memory_space<vmem>>, vector<128x128xf32>
    %cst = arith.constant dense<0.000000e+00> : vector<8x128xf32>
    %2 = tpu.matmul %0, %1, %cst {dimension_numbers = #tpu.dot_dimension_numbers<[1], [0], [0], [1], [0, 0, 1, 1], [], []>} : vector<8x128xf32>, vector<128x128xf32>, vector<8x128xf32> -> vector<8x128xf32>
    %c0_3 = arith.constant 0 : index
    %c0_4 = arith.constant 0 : index
    %3 = vector.load %arg3[%c0_3, %c0_4] : memref<1x128xf32, #tpu.memory_space<vmem>>, vector<1x128xf32>
    %4 = vector.broadcast %3 : vector<1x128xf32> to vector<8x128xf32>
    %5 = arith.mulf %2, %4 : vector<8x128xf32>
    %cst_5 = arith.constant dense<0.000000e+00> : vector<8x128xf32>
    %6 = tpu.matmul %5, %1, %cst_5 {dimension_numbers = #tpu.dot_dimension_numbers<[1], [1], [0], [0], [0, 0, 1, 0], [], []>} : vector<8x128xf32>, vector<128x128xf32>, vector<8x128xf32> -> vector<8x128xf32>
    %c0_6 = arith.constant 0 : index
    %c0_7 = arith.constant 0 : index
    %7 = vector.load %arg4[%c0_6, %c0_7] : memref<8x128xf32, #tpu.memory_space<vmem>>, vector<8x128xf32>
    tpu.vector_store %arg4[%c0_6, %c0_7], %6 {strides = array<i32>} : memref<8x128xf32, #tpu.memory_space<vmem>>, vector<8x128xf32>,
    return
  }
  func.func @transform_0(%arg0: i32) -> (i32, i32) {
    %c0_i32 = arith.constant 0 : i32
    %c0_i32_0 = arith.constant 0 : i32
    return %arg0, %c0_i32 : i32, i32
  }
  func.func @transform_1(%arg0: i32) -> (i32, i32) {
    %c0_i32 = arith.constant 0 : i32
    %c0_i32_0 = arith.constant 0 : i32
    %c0_i32_1 = arith.constant 0 : i32
    return %c0_i32, %c0_i32_0 : i32, i32
  }
  func.func @transform_2(%arg0: i32) -> (i32, i32) {
    %c0_i32 = arith.constant 0 : i32
    %c0_i32_0 = arith.constant 0 : i32
    %c0_i32_1 = arith.constant 0 : i32
    return %c0_i32, %c0_i32_0 : i32, i32
  }
  func.func @transform_3(%arg0: i32) -> (i32, i32) {
    %c0_i32 = arith.constant 0 : i32
    %c0_i32_0 = arith.constant 0 : i32
    return %arg0, %c0_i32 : i32, i32
  }
}

</mosaic_0001>

<llo_original>
// kernel: tpu_custom_call.1
$region0: #{tpu_custom_call.1}
  #allocation0 [shape = 'u32[]', space=smem, size = 0x4, offset = 0x4, fixed_abs, tag = 'smem constant byte address 0x4 - core index']
  #allocation1 [shape = 'u32[72,128]{1,0:T(1,128)}', space=vmem, size = 0x9000, scoped, tag = 'internal scratch']
  %s0 = inlined_call_operand.hbm [shape: f32[8,128], index: 0, kind: input, shape index: {}]
  %s1 = inlined_call_operand.hbm [shape: f32[128,128], index: 1, kind: input, shape index: {}]
  %s2 = inlined_call_operand.vmem [shape: f32[1,128], index: 2, kind: input, shape index: {}]
  %s3 = inlined_call_operand.hbm [shape: f32[8,128], index: 3, kind: output, shape index: {}]
  %s4 = sld [smem:[#allocation0]]
  $region30: #{tpu_custom_call.1} parent=0
    _
  %s6 = ssub.s32 1, %s4
  %s7 = scalar_select 0, %s6, %s4
  $region1: #{tpu_custom_call.1} parent=0
    #allocation2 [shape = 'u8[4096]{0}', space=vmem, size = 0x1000, scoped, tag = 'input window, operand 0, single buffered']
    #allocation3 [shape = 's32[1]{0}', space=sflag, size = 0x4, scoped, tag = 'scoped memory for tpu_custom_call.1']
    #allocation4 [shape = 's32[1]{0}', space=sflag, size = 0x4, scoped, tag = 'scoped memory for tpu_custom_call.1']
    #allocation5 [shape = 'u8[65536]{0}', space=vmem, size = 0x10000, scoped, tag = 'input window, operand 1, single buffered']
    #allocation6 [shape = 's32[1]{0}', space=sflag, size = 0x4, scoped, tag = 'scoped memory for tpu_custom_call.1']
    #allocation7 [shape = 'u8[4096]{0}', space=vmem, size = 0x1000, scoped, tag = 'output window, operand 0, single buffered']
    %8 = vsyncpa [#allocation3], 0
    %9 = vsyncpa [#allocation6], 0
    %10 = vsyncpa [#allocation4], 0
    // Predicated region
    $region2: #{tpu_custom_call.1} parent=1 // pred_check
      _
    $region3: #{tpu_custom_call.1} parent=1 // pred_check_branch
      %12 = sbr.rel (0) target = $region5
    $region4: #{tpu_custom_call.1} parent=1 // pred_region
      %14 = vsyncadd [#allocation3], 0
      %s16 = sshll.u32 %s0, 4
      %s17 = int_to_ptr.hbm [resolvable:$true] %s16
      %s18 = sshll.u32 [#allocation2], 4
      %s19 = int_to_ptr.vmem [resolvable:$true] %s18
      %21 = dma.hbm_to_vmem [thread:$0]  %s17, 128, %s19, [#allocation3]
    $region5: #{tpu_custom_call.1} parent=1 // pred_fallthru
      _
    // Predicated region
    $region6: #{tpu_custom_call.1} parent=1 // pred_check
      _
    $region7: #{tpu_custom_call.1} parent=1 // pred_check_branch
      %23 = sbr.rel (0) target = $region9
    $region8: #{tpu_custom_call.1} parent=1 // pred_region
      %25 = vsyncadd [#allocation6], 0
      %s26 = sshll.u32 %s1, 4
      %s27 = int_to_ptr.hbm [resolvable:$true] %s26
      %s28 = sshll.u32 [#allocation5], 4
      %s29 = int_to_ptr.vmem [resolvable:$true] %s28
      %34 = dma.hbm_to_vmem [thread:$0]  %s27, 2048, %s29, [#allocation6], 128, 128, 8
    $region9: #{tpu_custom_call.1} parent=1 // pred_fallthru
      _
    // Predicated region
    $region10: #{tpu_custom_call.1} parent=1 // pred_check
      _
    $region11: #{tpu_custom_call.1} parent=1 // pred_check_branch
      %36 = sbr.rel (0) target = $region13
    $region12: #{tpu_custom_call.1} parent=1 // pred_region
      _
    $region13: #{tpu_custom_call.1} parent=1 // pred_fallthru
      _
    // Predicated region
    $region14: #{tpu_custom_call.1} parent=1 // pred_check
      _
    $region15: #{tpu_custom_call.1} parent=1 // pred_check_branch
      %38 = sbr.rel (0) target = $region17
    $region16: #{tpu_custom_call.1} parent=1 // pred_region
      %40 = dma.done [#allocation3], 128
    $region17: #{tpu_custom_call.1} parent=1 // pred_fallthru
      _
    // Predicated region
    $region18: #{tpu_custom_call.1} parent=1 // pred_check
      _
    $region19: #{tpu_custom_call.1} parent=1 // pred_check_branch
      %42 = sbr.rel (0) target = $region21
    $region20: #{tpu_custom_call.1} parent=1 // pred_region
      %44 = dma.done [#allocation6], 2048
    $region21: #{tpu_custom_call.1} parent=1 // pred_fallthru
      _
    %v45 = vld [vmem:[#allocation2] sm:$0xff]
    %v46 = vld [vmem:[#allocation5] sm:$0xff]
    %v47 = vld [vmem:[#allocation5 + $0x8] sm:$0xff]
    %v48 = vld [vmem:[#allocation5 + $0x10] sm:$0xff]
    %v49 = vld [vmem:[#allocation5 + $0x18] sm:$0xff]
    %v50 = vld [vmem:[#allocation5 + $0x20] sm:$0xff]
    %v51 = vld [vmem:[#allocation5 + $0x28] sm:$0xff]
    %v52 = vld [vmem:[#allocation5 + $0x30] sm:$0xff]
    %v53 = vld [vmem:[#allocation5 + $0x38] sm:$0xff]
    %v54 = vld [vmem:[#allocation5 + $0x40] sm:$0xff]
    %v55 = vld [vmem:[#allocation5 + $0x48] sm:$0xff]
    %v56 = vld [vmem:[#allocation5 + $0x50] sm:$0xff]
    %v57 = vld [vmem:[#allocation5 + $0x58] sm:$0xff]
    %v58 = vld [vmem:[#allocation5 + $0x60] sm:$0xff]
    %v59 = vld [vmem:[#allocation5 + $0x68] sm:$0xff]
    %v60 = vld [vmem:[#allocation5 + $0x70] sm:$0xff]
    %v61 = vld [vmem:[#allocation5 + $0x78] sm:$0xff]
    %62 = vmatpush.msra.mxu0 %v61
    %63 = vmatpush.msra.mxu0 %v60
    %64 = vmatpush.msra.mxu0 %v59
    %65 = vmatpush.msra.mxu0 %v58
    %66 = vmatpush.msra.mxu0 %v57
    %67 = vmatpush.msra.mxu0 %v56
    %68 = vmatpush.msra.mxu0 %v55
    %69 = vmatpush.msra.mxu0 %v54
    %70 = vmatpush.msra.mxu0 %v53
    %71 = vmatpush.msra.mxu0 %v52
    %72 = vmatpush.msra.mxu0 %v51
    %73 = vmatpush.msra.mxu0 %v50
    %74 = vmatpush.msra.mxu0 %v49
    %75 = vmatpush.msra.mxu0 %v48
    %76 = vmatpush.msra.mxu0 %v47
    %77 = vmatpush.msra.mxu0 %v46
    %78 = vmatmul.f32.gmra.mxu0 %v45
    %v79 = vpop.f32.mrf.mxu0
    %v80 = vadd.f32 0.0, %v79
    %81 = vdwg.mxu0
    %v82 = vld [vmem:[%s2] sm:$0x1]
    %v84 = vperm.slane %v82, 0
    %v86 = vmul.f32 %v80, %v84
    %87 = vmatpush.xpose.msra.mxu0 %v61
    %88 = vmatpush.xpose.msra.mxu0 %v60
    %89 = vmatpush.xpose.msra.mxu0 %v59
    %90 = vmatpush.xpose.msra.mxu0 %v58
    %91 = vmatpush.xpose.msra.mxu0 %v57
    %92 = vmatpush.xpose.msra.mxu0 %v56
    %93 = vmatpush.xpose.msra.mxu0 %v55
    %94 = vmatpush.xpose.msra.mxu0 %v54
    %95 = vmatpush.xpose.msra.mxu0 %v53
    %96 = vmatpush.xpose.msra.mxu0 %v52
    %97 = vmatpush.xpose.msra.mxu0 %v51
    %98 = vmatpush.xpose.msra.mxu0 %v50
    %99 = vmatpush.xpose.msra.mxu0 %v49
    %100 = vmatpush.xpose.msra.mxu0 %v48
    %101 = vmatpush.xpose.msra.mxu0 %v47
    %102 = vmatpush.xpose.msra.mxu0 %v46
    %103 = vmatmul.f32.gmra.mxu0 %v86
    %v104 = vpop.f32.mrf.mxu0
    %v105 = vadd.f32 0.0, %v104
    %106 = vdwg.mxu0
    %107 = vst [vmem:[#allocation7] sm:$0xff] %v105
    // Predicated region
    $region22: #{tpu_custom_call.1} parent=1 // pred_check
      _
    $region23: #{tpu_custom_call.1} parent=1 // pred_check_branch
      %109 = sbr.rel (0) target = $region25
    $region24: #{tpu_custom_call.1} parent=1 // pred_region
      %111 = vsyncadd [#allocation4], 0
      %s113 = sshll.u32 [#allocation7], 4
      %s114 = int_to_ptr.vmem [resolvable:$true] %s113
      %s115 = sshll.u32 %s3, 4
      %s116 = int_to_ptr.hbm [resolvable:$true] %s115
      %118 = dma.vmem_to_hbm [thread:$0]  %s114, 128, %s116, [#allocation4]
    $region25: #{tpu_custom_call.1} parent=1 // pred_fallthru
      _
    // Predicated region
    $region26: #{tpu_custom_call.1} parent=1 // pred_check
      _
    $region27: #{tpu_custom_call.1} parent=1 // pred_check_branch
      %120 = sbr.rel (0) target = $region29
    $region28: #{tpu_custom_call.1} parent=1 // pred_region
      %122 = dma.done [#allocation4], 128
    $region29: #{tpu_custom_call.1} parent=1 // pred_fallthru
      _
    %123 = vsyncpa [#allocation3], 1
    %124 = vsyncpa [#allocation6], 1
    %125 = vsyncpa [#allocation4], 1

</llo_original>
